<compile_context>
chip_gen: v6e
topology: v6e:2x2x1
jax: 0.10.0
libtpu: 0.0.40
codegen_flags: <defaults>
</compile_context>

<pallas_src>
import math

import jax
import jax.numpy as jnp
from jax import lax
from jax.experimental import pallas as pl
from jax.experimental.pallas import tpu as pltpu


def _linear_kernel(x_ref, w_ref, b_ref, o_ref):
    # x_ref: (TM, K) native dtype   w_ref: (N, K) native dtype
    # b_ref: (1, N) f32             o_ref: (TM, N) x.dtype
    x = x_ref[...].astype(jnp.bfloat16)      # cast at the VMEM/MXU boundary (VPU, cheap)
    w = w_ref[...].astype(jnp.bfloat16)      # tiny, resident across grid steps
    # Contract trailing axes of both operands => x @ W^T directly on the MXU.
    acc = lax.dot_general(
        x, w,
        dimension_numbers=(((1,), (1,)), ((), ())),
        preferred_element_type=jnp.float32,
    )
    o_ref[...] = (acc + b_ref[...]).astype(o_ref.dtype)


def _round_up(v, mult):
    return ((v + mult - 1) // mult) * mult


def single_linear_classifier(x, weight, bias, *, tile_m=None):
    """y = x @ weight.T + bias over the last axis of x (== nn.Linear forward).

    x:      (..., hidden)
    weight: (num_label, hidden)  -- PyTorch nn.Linear convention, passed as-is
    bias:   (num_label,)
    returns (..., num_label) in x.dtype
    """
    *lead, hidden = x.shape
    num_label, k = weight.shape
    assert k == hidden, "weight must be (num_label, hidden)"

    m = math.prod(lead) if lead else 1
    x2d = x.reshape(m, hidden)
    b2d = bias.reshape(1, num_label).astype(jnp.float32)

    x_itemsize = jnp.dtype(x.dtype).itemsize
    if tile_m is None:
        # ~4 MiB per x buffer (double-buffered => ~8 MiB) keeps us far under the
        # scoped-VMEM default on every generation (v5e 16 MiB, v6e/v7x 32 MiB)
        # while amortizing the ~0.35 us/step grid overhead.
        budget = 4 * 1024 * 1024
        tile_m = (budget // max(1, hidden * x_itemsize)) // 8 * 8
        tile_m = min(2048, max(8, tile_m))
    tile_m = max(8, _round_up(tile_m, 8))
    tile_m = min(tile_m, _round_up(m, 8))   # never larger than needed
    grid_m = pl.cdiv(m, tile_m)             # boundary block handled by Pallas clamping

    out_itemsize = jnp.dtype(x.dtype).itemsize
    cost = pl.CostEstimate(
        flops=2 * m * hidden * num_label,
        transcendentals=0,
        bytes_accessed=int(x2d.size * x_itemsize
                           + weight.size * jnp.dtype(weight.dtype).itemsize
                           + b2d.size * b2d.dtype.itemsize
                           + m * num_label * out_itemsize),
    )

    out2d = pl.pallas_call(
        _linear_kernel,
        out_shape=jax.ShapeDtypeStruct((m, num_label), x.dtype),
        grid_spec=pltpu.PrefetchScalarGridSpec(
            num_scalar_prefetch=0,
            grid=(grid_m,),
            in_specs=[
                pl.BlockSpec((tile_m, hidden), lambda i: (i, 0)),     # x tile (pipelined)
                pl.BlockSpec((num_label, hidden), lambda i: (0, 0)),  # full W, resident
                pl.BlockSpec((1, num_label), lambda i: (0, 0)),       # bias, resident
            ],
            out_specs=pl.BlockSpec((tile_m, num_label), lambda i: (i, 0)),
        ),
        compiler_params=pltpu.CompilerParams(
            # Multi-step M grid => double-buffered DMA + dual-TensorCore sharding.
            dimension_semantics=("parallel",),
        ),
        cost_estimate=cost,
    )(x2d, weight, b2d)

    return out2d.reshape(*lead, num_label)


if __name__ == "__main__":
    batch, seq, hidden, num_label = 2, 8, 32, 8

    key = jax.random.PRNGKey(0)
    kx, kw, kb = jax.random.split(key, 3)

    # Deterministic synthetic parameters (uniform, roughly matching nn.Linear's scale).
    bound = 1.0 / (hidden ** 0.5)
    x = jax.random.normal(kx, (batch, seq, hidden), dtype=jnp.float32)
    weight = jax.random.uniform(kw, (num_label, hidden), minval=-bound, maxval=bound,
                                dtype=jnp.float32)
    bias = jax.random.uniform(kb, (num_label,), minval=-bound, maxval=bound,
                              dtype=jnp.float32)

    out = single_linear_classifier(x, weight, bias)
    out = jax.block_until_ready(out)
    assert out.shape == (batch, seq, num_label)

    # Matched-precision reference (bf16 operands, f32 accumulate) — same as kernel.
    x_b = x.astype(jnp.bfloat16).astype(jnp.float32)
    w_b = weight.astype(jnp.bfloat16).astype(jnp.float32)
    ref_bf16 = x_b @ w_b.T + bias
    assert jnp.allclose(out, ref_bf16, atol=1e-4, rtol=1e-4), "mismatch vs bf16 reference"

    # Full-f32 nn.Linear reference — loose tolerance to cover bf16 rounding of operands.
    ref_f32 = x @ weight.T + bias
    assert jnp.allclose(out, ref_f32, atol=2e-2, rtol=2e-2), "mismatch vs f32 reference"

    # Exercise the non-divisible-M / multi-step-grid path (partial boundary block).
    x2 = jax.random.normal(kx, (3, 5, hidden), dtype=jnp.float32)   # m = 15
    out2 = jax.block_until_ready(
        single_linear_classifier(x2, weight, bias, tile_m=8))
    x2_b = x2.astype(jnp.bfloat16).astype(jnp.float32)
    ref2 = x2_b @ w_b.T + bias
    assert out2.shape == (3, 5, num_label)
    assert jnp.allclose(out2, ref2, atol=1e-4, rtol=1e-4), "mismatch on partial-block path"

    print("KERNEL_OK")
</pallas_src>

<mosaic_0001>
module attributes {stable_mosaic.version = 11 : i64} {
  func.func @_linear_kernel(%arg0: i32, %arg1: memref<16x32xf32, #tpu.memory_space<vmem>>, %arg2: memref<8x32xf32, #tpu.memory_space<vmem>>, %arg3: memref<1x8xf32, #tpu.memory_space<vmem>>, %arg4: memref<16x8xf32, #tpu.memory_space<vmem>>) attributes {dimension_semantics = [#tpu.dimension_semantics<parallel>], iteration_bounds = array<i64: 1>, scalar_prefetch = 0 : i64, scratch_operands = 0 : i64, tpu.core_type = #tpu.core_type<tc>, window_params = [{transform_indices = @transform_0, window_bounds = array<i64: 16, 32>}, {pipeline_mode = #tpu.pipeline_mode<synchronous>, transform_indices = @transform_1, window_bounds = array<i64: 8, 32>}, {pipeline_mode = #tpu.pipeline_mode<synchronous>, transform_indices = @transform_2, window_bounds = array<i64: 1, 8>}, {transform_indices = @transform_3, window_bounds = array<i64: 16, 8>}]} {
    %c0 = arith.constant 0 : index
    %c0_0 = arith.constant 0 : index
    %0 = vector.load %arg1[%c0, %c0_0] : memref<16x32xf32, #tpu.memory_space<vmem>>, vector<16x32xf32>
    %1 = arith.truncf %0 : vector<16x32xf32> to vector<16x32xbf16>
    %c0_1 = arith.constant 0 : index
    %c0_2 = arith.constant 0 : index
    %2 = vector.load %arg2[%c0_1, %c0_2] : memref<8x32xf32, #tpu.memory_space<vmem>>, vector<8x32xf32>
    %3 = arith.truncf %2 : vector<8x32xf32> to vector<8x32xbf16>
    %cst = arith.constant dense<0.000000e+00> : vector<16x8xf32>
    %4 = tpu.matmul %1, %3, %cst {dimension_numbers = #tpu.dot_dimension_numbers<[1], [1], [0], [0], [0, 0, 1, 0], [], []>} : vector<16x32xbf16>, vector<8x32xbf16>, vector<16x8xf32> -> vector<16x8xf32>
    %c0_3 = arith.constant 0 : index
    %c0_4 = arith.constant 0 : index
    %5 = vector.load %arg3[%c0_3, %c0_4] : memref<1x8xf32, #tpu.memory_space<vmem>>, vector<1x8xf32>
    %6 = vector.broadcast %5 : vector<1x8xf32> to vector<16x8xf32>
    %7 = arith.addf %4, %6 : vector<16x8xf32>
    %c0_5 = arith.constant 0 : index
    %c0_6 = arith.constant 0 : index
    %8 = vector.load %arg4[%c0_5, %c0_6] : memref<16x8xf32, #tpu.memory_space<vmem>>, vector<16x8xf32>
    tpu.vector_store %arg4[%c0_5, %c0_6], %7 {strides = array<i32>} : memref<16x8xf32, #tpu.memory_space<vmem>>, vector<16x8xf32>,
    return
  }
  func.func @transform_0(%arg0: i32) -> (i32, i32) {
    %c0_i32 = arith.constant 0 : i32
    %c0_i32_0 = arith.constant 0 : i32
    return %arg0, %c0_i32 : i32, i32
  }
  func.func @transform_1(%arg0: i32) -> (i32, i32) {
    %c0_i32 = arith.constant 0 : i32
    %c0_i32_0 = arith.constant 0 : i32
    %c0_i32_1 = arith.constant 0 : i32
    return %c0_i32, %c0_i32_0 : i32, i32
  }
  func.func @transform_2(%arg0: i32) -> (i32, i32) {
    %c0_i32 = arith.constant 0 : i32
    %c0_i32_0 = arith.constant 0 : i32
    %c0_i32_1 = arith.constant 0 : i32
    return %c0_i32, %c0_i32_0 : i32, i32
  }
  func.func @transform_3(%arg0: i32) -> (i32, i32) {
    %c0_i32 = arith.constant 0 : i32
    %c0_i32_0 = arith.constant 0 : i32
    return %arg0, %c0_i32 : i32, i32
  }
}

</mosaic_0001>

<llo_original>
// kernel: tpu_custom_call.1
$region0: #{tpu_custom_call.1}
  #allocation0 [shape = 'u32[]', space=smem, size = 0x4, offset = 0x4, fixed_abs, tag = 'smem constant byte address 0x4 - core index']
  #allocation1 [shape = 'u32[144,128]{1,0:T(1,128)}', space=vmem, size = 0x12000, scoped, tag = 'internal scratch']
  %s0 = inlined_call_operand.hbm [shape: f32[16,32], index: 0, kind: input, shape index: {}]
  %s1 = inlined_call_operand.hbm [shape: f32[8,32], index: 1, kind: input, shape index: {}]
  %s2 = inlined_call_operand.vmem [shape: f32[1,8], index: 2, kind: input, shape index: {}]
  %s3 = inlined_call_operand.vmem [shape: f32[16,8], index: 3, kind: output, shape index: {}]
  %s4 = sld [smem:[#allocation0]]
  $region30: #{tpu_custom_call.1} parent=0
    _
  %s6 = ssub.s32 1, %s4
  %s7 = scalar_select 0, %s6, %s4
  $region1: #{tpu_custom_call.1} parent=0
    #allocation2 [shape = 'u8[8192]{0}', space=vmem, size = 0x2000, scoped, tag = 'input window, operand 0, single buffered']
    #allocation3 [shape = 's32[1]{0}', space=sflag, size = 0x4, scoped, tag = 'scoped memory for tpu_custom_call.1']
    #allocation4 [shape = 'u8[4096]{0}', space=vmem, size = 0x1000, scoped, tag = 'input window, operand 1, single buffered']
    #allocation5 [shape = 's32[1]{0}', space=sflag, size = 0x4, scoped, tag = 'scoped memory for tpu_custom_call.1']
    %8 = vsyncpa [#allocation3], 0
    %9 = vsyncpa [#allocation5], 0
    // Predicated region
    $region2: #{tpu_custom_call.1} parent=1 // pred_check
      _
    $region3: #{tpu_custom_call.1} parent=1 // pred_check_branch
      %11 = sbr.rel (0) target = $region5
    $region4: #{tpu_custom_call.1} parent=1 // pred_region
      %s13 = ssub.s32 256, 256
      %14 = vsyncadd [#allocation3], %s13
      %s15 = sshll.u32 [#allocation2], 4
      %s16 = int_to_ptr.vmem [resolvable:$true] %s15
      %21 = dma.hbm_to_vmem [thread:$0]  %s0, 256, %s16, [#allocation3], 128, 128, 8
    $region5: #{tpu_custom_call.1} parent=1 // pred_fallthru
      _
    // Predicated region
    $region6: #{tpu_custom_call.1} parent=1 // pred_check
      _
    $region7: #{tpu_custom_call.1} parent=1 // pred_check_branch
      %23 = sbr.rel (0) target = $region9
    $region8: #{tpu_custom_call.1} parent=1 // pred_region
      %s25 = ssub.s32 128, 128
      %26 = vsyncadd [#allocation5], %s25
      %s28 = sshll.u32 [#allocation4], 4
      %s29 = int_to_ptr.vmem [resolvable:$true] %s28
      %31 = dma.hbm_to_vmem [thread:$0]  %s1, 128, %s29, [#allocation5]
    $region9: #{tpu_custom_call.1} parent=1 // pred_fallthru
      _
    // Predicated region
    $region10: #{tpu_custom_call.1} parent=1 // pred_check
      _
    $region11: #{tpu_custom_call.1} parent=1 // pred_check_branch
      %33 = sbr.rel (0) target = $region13
    $region12: #{tpu_custom_call.1} parent=1 // pred_region
      _
    $region13: #{tpu_custom_call.1} parent=1 // pred_fallthru
      _
    // Predicated region
    $region14: #{tpu_custom_call.1} parent=1 // pred_check
      _
    $region15: #{tpu_custom_call.1} parent=1 // pred_check_branch
      %35 = sbr.rel (0) target = $region17
    $region16: #{tpu_custom_call.1} parent=1 // pred_region
      %36 = dma.done [#allocation3], 256
    $region17: #{tpu_custom_call.1} parent=1 // pred_fallthru
      _
    // Predicated region
    $region18: #{tpu_custom_call.1} parent=1 // pred_check
      _
    $region19: #{tpu_custom_call.1} parent=1 // pred_check_branch
      %38 = sbr.rel (0) target = $region21
    $region20: #{tpu_custom_call.1} parent=1 // pred_region
      %39 = dma.done [#allocation5], 128
    $region21: #{tpu_custom_call.1} parent=1 // pred_fallthru
      _
    %v41 = vld [vmem:[#allocation2] sm:$0xff]
    %v42 = vld [vmem:[#allocation2 + $0x8] sm:$0xff]
    %v43 = vpack.c.bf16 %v42, %v41
    %v44 = vld [vmem:[#allocation4] sm:$0xff]
    %v45 = vpack.c.bf16 %v44, %v44
    %v46 = vld [vmem:[%s2] sm:$0x1]
    %v48 = vlaneseq
    %v49 = vshrl.u32 %v48, 7
    %v50 = vsub.s32 0, %v49
    %v51 = vrot.slane %v46, %v50
    %vm53 = vcmask 261120
    %v55 = vsel %vm53, %v43, 0
    %v58 = vsel %vm53, %v45, 0
    %60 = vmatprep.subr.bf16.mxu0 0
    %61 = vmatpush1.bf16.xpose.msra.mxu0 0
    %62 = vmatprep.subr.bf16.mxu0 0
    %63 = vmatpush1.bf16.xpose.msra.mxu0 0
    %64 = vmatprep.subr.bf16.mxu0 0
    %65 = vmatpush1.bf16.xpose.msra.mxu0 0
    %66 = vmatprep.subr.bf16.mxu0 0
    %67 = vmatpush1.bf16.xpose.msra.mxu0 0
    %68 = vmatprep.subr.bf16.mxu0 0
    %69 = vmatpush1.bf16.xpose.msra.mxu0 0
    %70 = vmatprep.subr.bf16.mxu0 0
    %71 = vmatpush1.bf16.xpose.msra.mxu0 0
    %72 = vmatprep.subr.bf16.mxu0 0
    %73 = vmatpush1.bf16.xpose.msra.mxu0 0
    %74 = vmatprep.subr.bf16.mxu0 0
    %75 = vmatpush1.bf16.xpose.msra.mxu0 %v58
    %76 = vmatprep.subr.bf16.mxu0 0
    %77 = vmatpush2.bf16.xpose.msra.mxu0 0
    %78 = vmatprep.subr.bf16.mxu0 0
    %79 = vmatpush2.bf16.xpose.msra.mxu0 0
    %80 = vmatprep.subr.bf16.mxu0 0
    %81 = vmatpush2.bf16.xpose.msra.mxu0 0
    %82 = vmatprep.subr.bf16.mxu0 0
    %83 = vmatpush2.bf16.xpose.msra.mxu0 0
    %84 = vmatprep.subr.bf16.mxu0 0
    %85 = vmatpush2.bf16.xpose.msra.mxu0 0
    %86 = vmatprep.subr.bf16.mxu0 0
    %87 = vmatpush2.bf16.xpose.msra.mxu0 0
    %88 = vmatprep.subr.bf16.mxu0 0
    %89 = vmatpush2.bf16.xpose.msra.mxu0 0
    %90 = vmatprep.subr.bf16.mxu0 0
    %91 = vmatpush2.bf16.xpose.msra.mxu0 0
    %92 = vmatprep.mubr.bf16.mxu0 0
    %93 = vmatmul.mubr.bf16.gmra.mxu0 %v55
    %v94 = vpop.f32.mrf.mxu0
    %v95 = vadd.f32 %v51, %v94
    %v96 = vpop.f32.mrf.mxu0
    %v97 = vpop.f32.mrf.mxu0
    %v98 = vadd.f32 %v51, %v97
    %v99 = vpop.f32.mrf.mxu0
    %100 = vdwg.mxu0
    %vm101 = vcmask 64512
    %102 = vst.msk [vmem:[%s3] sm:$0xff] %vm101, %v95
    %103 = vst.msk [vmem:[%s3 + $0x8] sm:$0xff] %vm101, %v98
    // Predicated region
    $region22: #{tpu_custom_call.1} parent=1 // pred_check
      _
    $region23: #{tpu_custom_call.1} parent=1 // pred_check_branch
      %105 = sbr.rel (0) target = $region25
    $region24: #{tpu_custom_call.1} parent=1 // pred_region
      _
    $region25: #{tpu_custom_call.1} parent=1 // pred_fallthru
      _
    // Predicated region
    $region26: #{tpu_custom_call.1} parent=1 // pred_check
      _
    $region27: #{tpu_custom_call.1} parent=1 // pred_check_branch
      %107 = sbr.rel (0) target = $region29
    $region28: #{tpu_custom_call.1} parent=1 // pred_region
      _
    $region29: #{tpu_custom_call.1} parent=1 // pred_fallthru
      _
    %108 = vsyncpa [#allocation3], 1
    %109 = vsyncpa [#allocation5], 1

</llo_original>
